<compile_context>
chip_gen: v7x
topology: tpu7x:2x2x1
jax: 0.10.0
libtpu: 0.0.40
codegen_flags: <defaults>
</compile_context>

<pallas_src>
import math
from functools import partial

import jax
import jax.numpy as jnp
from jax.experimental import pallas as pl
from jax.experimental.pallas import tpu as pltpu


# ---------------------------------------------------------------------------
# Pallas kernel: fused expert-mix + conv-as-matmul (+ bias)
# ---------------------------------------------------------------------------

def _condconv_kernel(routing_ref, wexp_ref, bexp_ref, patches_ref, out_ref,
                     wmix_ref, bmix_ref):
    """One (sample b, HW-tile) grid point.

    routing_ref: (B*E,)         f32  SMEM   flattened routing weights
    wexp_ref:    (E, OCp, CKKp) bf16 VMEM   expert weights (resident across grid)
    bexp_ref:    (E, OCp, 1)    f32  VMEM   expert biases  (resident across grid)
    patches_ref: (CKKp, tHW)    bf16 VMEM   im2col tile of sample b
    out_ref:     (OCp, tHW)                 lane-dense on HW
    wmix_ref:    (OCp, CKKp)    bf16 VMEM scratch  mixed weight (per-sample cache)
    bmix_ref:    (OCp, 1)       f32  VMEM scratch  mixed bias   (per-sample cache)
    """
    b = pl.program_id(0)
    num_experts = wexp_ref.shape[0]

    # Mix experts once per sample (first HW tile); cache in scratch for later tiles.
    @pl.when(pl.program_id(1) == 0)
    def _mix():
        r0 = routing_ref[b * num_experts]
        w = r0 * wexp_ref[0].astype(jnp.float32)
        bias = r0 * bexp_ref[0]
        for e in range(1, num_experts):
            r = routing_ref[b * num_experts + e]
            w = w + r * wexp_ref[e].astype(jnp.float32)
            bias = bias + r * bexp_ref[e]
        wmix_ref[...] = w.astype(jnp.bfloat16)
        bmix_ref[...] = bias

    # Conv-as-matmul on the MXU: bf16 inputs, f32 accumulate.
    acc = jnp.dot(wmix_ref[...], patches_ref[...],
                  preferred_element_type=jnp.float32)
    out_ref[...] = (acc + bmix_ref[...]).astype(out_ref.dtype)


# ---------------------------------------------------------------------------
# Glue (plain JAX): padding calc, im2col, forward wrapper
# ---------------------------------------------------------------------------

def _to2(v):
    return tuple(v) if isinstance(v, (tuple, list)) else (v, v)


def _get_padding(kernel_size, stride, dilation):
    # timm get_padding(): symmetric static padding for padding=''.
    return ((stride - 1) + dilation * (kernel_size - 1)) // 2


def _round_up(v, m):
    return -(-v // m) * m


def _im2col_nchw(x, kernel_size, stride, padding, dilation):
    """x: (B, C, H, W) -> patches (B, C*kh*kw, Ho*Wo).

    Row ordering matches the PyTorch flatten of (OC, C, kh, kw): C-major, then kh,
    then kw. HW is kept LAST so the Pallas output is lane-dense on HW.
    """
    B, C, H, W = x.shape
    kh, kw = kernel_size
    sh, sw = stride
    ph, pw = padding
    dh, dw = dilation
    xp = jnp.pad(x, ((0, 0), (0, 0), (ph, ph), (pw, pw)))
    Hp, Wp = H + 2 * ph, W + 2 * pw
    Ho = (Hp - dh * (kh - 1) - 1) // sh + 1
    Wo = (Wp - dw * (kw - 1) - 1) // sw + 1
    cols = []
    for i in range(kh):
        for j in range(kw):
            cols.append(xp[:, :,
                           i * dh: i * dh + (Ho - 1) * sh + 1: sh,
                           j * dw: j * dw + (Wo - 1) * sw + 1: sw])  # (B, C, Ho, Wo)
    cols = jnp.stack(cols, axis=2)                       # (B, C, kh*kw, Ho, Wo)
    return cols.reshape(B, C * kh * kw, Ho * Wo), Ho, Wo  # (B, CKK, HW)


@partial(jax.jit,
         static_argnames=("out_channels", "kernel_size", "stride", "padding",
                          "dilation"))
def condconv_forward(x, routing, w_exp, b_exp, *, out_channels, kernel_size,
                     stride, padding, dilation):
    B, C, H, W = x.shape
    kh, kw = kernel_size
    OC = out_channels
    E = routing.shape[1]
    CKK = C * kh * kw

    # im2col on bf16 activations (halves the dominant patches HBM stream).
    patches, Ho, Wo = _im2col_nchw(x.astype(jnp.bfloat16), kernel_size, stride,
                                   padding, dilation)
    HW = Ho * Wo

    # Tiling: HW tiles are lane-dense multiples of 128 (<= 512). CKK is padded to the
    # bf16 sublane granularity, OC to f32 sublane granularity (zero patch rows /
    # zero weight rows contribute nothing and are sliced off afterwards).
    tHW = min(512, _round_up(HW, 128))
    HWp = _round_up(HW, tHW)
    CKKp = _round_up(CKK, 16)
    OCp = _round_up(OC, 8)
    patches = jnp.pad(patches, ((0, 0), (0, CKKp - CKK), (0, HWp - HW)))

    # Expert params: (E, P) -> (E, OCp, CKKp) bf16, (E, OC) -> (E, OCp, 1) f32.
    wexp = w_exp.reshape(E, OC, CKK)
    wexp = jnp.pad(wexp, ((0, 0), (0, OCp - OC), (0, CKKp - CKK))).astype(jnp.bfloat16)
    bexp = jnp.pad(b_exp.astype(jnp.float32), ((0, 0), (0, OCp - OC)))
    bexp = bexp.reshape(E, OCp, 1)
    routing_flat = routing.astype(jnp.float32).reshape(B * E)

    grid = (B, HWp // tHW)

    # Explicit VMEM budget: double-buffered inputs/outputs + resident expert params +
    # scratch + f32 mixing temporaries, capped so the same sizing also fits v7x's
    # smaller (64 MiB physical) VMEM.
    out_itemsize = jnp.dtype(x.dtype).itemsize
    vmem_bytes = (2 * (E * OCp * CKKp * 2 + E * OCp * 4
                       + CKKp * tHW * 2 + OCp * tHW * out_itemsize)
                  + OCp * CKKp * 2 + OCp * 4          # scratch
                  + OCp * CKKp * 4 + OCp * tHW * 4)   # f32 temporaries
    vmem_limit = int(min(max(2 * vmem_bytes, 16 * 2 ** 20), 48 * 2 ** 20))

    out = pl.pallas_call(
        _condconv_kernel,
        out_shape=jax.ShapeDtypeStruct((B, OCp, HWp), x.dtype),
        grid=grid,
        in_specs=[
            pl.BlockSpec(memory_space=pltpu.MemorySpace.SMEM),           # routing
            pl.BlockSpec((E, OCp, CKKp), lambda b, hw: (0, 0, 0)),       # expert W (resident)
            pl.BlockSpec((E, OCp, 1), lambda b, hw: (0, 0, 0)),          # expert b (resident)
            pl.BlockSpec((None, CKKp, tHW), lambda b, hw: (b, 0, hw)),   # patches tile
        ],
        out_specs=pl.BlockSpec((None, OCp, tHW), lambda b, hw: (b, 0, hw)),
        scratch_shapes=[
            pltpu.VMEM((OCp, CKKp), jnp.bfloat16),   # mixed weight cache (per sample)
            pltpu.VMEM((OCp, 1), jnp.float32),       # mixed bias cache
        ],
        compiler_params=pltpu.CompilerParams(
            dimension_semantics=("parallel", "arbitrary"),
            vmem_limit_bytes=vmem_limit),
    )(routing_flat, wexp, bexp, patches)

    # (B, OCp, HWp) -> (B, OC, Ho, Wo): slice off OC/HW padding; no transpose needed.
    return out[:, :OC, :HW].reshape(B, OC, Ho, Wo)


# ---------------------------------------------------------------------------
# Module-equivalent wrapper with deterministic init
# ---------------------------------------------------------------------------

class CondConv2dPallas:
    def __init__(self, in_channels, out_channels, kernel_size=3, stride=1,
                 padding='', dilation=1, groups=1, bias=False, num_experts=4,
                 key=None):
        assert groups == 1  # TODO(synk): grouped CondConv (groups > 1) not implemented
        self.in_channels = in_channels
        self.out_channels = out_channels
        self.kernel_size = _to2(kernel_size)
        self.stride = _to2(stride)
        self.dilation = _to2(dilation)
        if isinstance(padding, str):
            # '' / 'same' static-friendly config -> symmetric static padding.
            self.padding = tuple(_get_padding(k, s, d) for k, s, d in
                                 zip(self.kernel_size, self.stride, self.dilation))
        else:
            self.padding = _to2(padding)
        self.num_experts = num_experts

        fan_in = (in_channels // groups) * self.kernel_size[0] * self.kernel_size[1]
        num_params = out_channels * fan_in
        key = jax.random.PRNGKey(0) if key is None else key
        kw_, kb_ = jax.random.split(key)
        # kaiming_uniform_(a=sqrt(5)) on each expert's (OC, C/g, kh, kw) view
        # reduces to U(-1/sqrt(fan_in), 1/sqrt(fan_in)).
        bound = 1.0 / math.sqrt(fan_in)
        self.weight = jax.random.uniform(kw_, (num_experts, num_params),
                                         jnp.float32, -bound, bound)
        if bias:
            self.bias = jax.random.uniform(kb_, (num_experts, out_channels),
                                           jnp.float32, -bound, bound)
        else:
            self.bias = None

    def __call__(self, x, routing_weights):
        b_exp = (self.bias if self.bias is not None
                 else jnp.zeros((self.num_experts, self.out_channels), jnp.float32))
        return condconv_forward(x, routing_weights, self.weight, b_exp,
                                out_channels=self.out_channels,
                                kernel_size=self.kernel_size,
                                stride=self.stride,
                                padding=self.padding,
                                dilation=self.dilation)


# ---------------------------------------------------------------------------
# Pure-JAX reference (lax.conv path) mirroring the kernel's bf16 quantization
# points, for tight verification of the bf16-MXU kernel.
# ---------------------------------------------------------------------------

def reference_forward(x, routing, w_exp, b_exp, *, out_channels, kernel_size,
                      stride, padding, dilation):
    B, C, H, W = x.shape
    kh, kw = kernel_size
    E = routing.shape[1]
    # Same quantization points as the kernel: bf16 expert weights, f32 mix (same
    # left-to-right association), bf16 mixed weight, bf16 activations, f32 accumulate.
    wq = w_exp.astype(jnp.bfloat16).astype(jnp.float32).reshape(E, out_channels, C, kh, kw)
    wmix = routing[:, 0, None, None, None, None] * wq[0]
    bmix = routing[:, 0, None] * b_exp[0]
    for e in range(1, E):
        wmix = wmix + routing[:, e, None, None, None, None] * wq[e]
        bmix = bmix + routing[:, e, None] * b_exp[e]
    wmix = wmix.astype(jnp.bfloat16).astype(jnp.float32)
    xq = x.astype(jnp.bfloat16).astype(jnp.float32)
    outs = []
    for b in range(B):
        o = jax.lax.conv_general_dilated(
            xq[b:b + 1], wmix[b],
            window_strides=stride,
            padding=[(padding[0], padding[0]), (padding[1], padding[1])],
            rhs_dilation=dilation,
            dimension_numbers=('NCHW', 'OIHW', 'NCHW'),
            precision=jax.lax.Precision.HIGHEST)
        outs.append(o[0] + bmix[b][:, None, None])
    return jnp.stack(outs, axis=0)


if __name__ == "__main__":
    B, C, H, W = 2, 4, 16, 16
    OC, K, E = 8, 3, 4

    key = jax.random.PRNGKey(0)
    kx, kr, kp = jax.random.split(key, 3)
    x = jax.random.normal(kx, (B, C, H, W), jnp.float32)
    routing = jax.nn.sigmoid(jax.random.normal(kr, (B, E), jnp.float32))

    mod = CondConv2dPallas(C, OC, kernel_size=K, stride=1, padding='',
                           dilation=1, groups=1, bias=True, num_experts=E, key=kp)

    out = mod(x, routing)
    out = jax.block_until_ready(out)

    ref = reference_forward(
        x, routing, mod.weight,
        mod.bias if mod.bias is not None else jnp.zeros((E, OC), jnp.float32),
        out_channels=OC, kernel_size=mod.kernel_size, stride=mod.stride,
        padding=mod.padding, dilation=mod.dilation)

    assert out.shape == (B, OC, H, W), out.shape
    assert jnp.allclose(out, ref, atol=1e-2, rtol=1e-2), \
        f"max abs diff {jnp.max(jnp.abs(out - ref))}"
    print("KERNEL_OK")
</pallas_src>

<mosaic_0001>
module attributes {stable_mosaic.version = 11 : i64} {
  func.func @_condconv_kernel(%arg0: i32, %arg1: i32, %arg2: memref<8xf32, #tpu.memory_space<smem>>, %arg3: memref<4x8x48xbf16, #tpu.memory_space<vmem>>, %arg4: memref<4x8x1xf32, #tpu.memory_space<vmem>>, %arg5: memref<1x48x256xbf16, #tpu.memory_space<vmem>>, %arg6: memref<1x8x256xf32, #tpu.memory_space<vmem>>, %arg7: memref<8x48xbf16, #tpu.memory_space<vmem>>, %arg8: memref<8x1xf32, #tpu.memory_space<vmem>>) attributes {dimension_semantics = [#tpu.dimension_semantics<parallel>, #tpu.dimension_semantics<arbitrary>], iteration_bounds = array<i64: 2, 1>, scalar_prefetch = 0 : i64, scratch_operands = 2 : i64, tpu.core_type = #tpu.core_type<tc>, window_params = [{transform_indices = @transform_0, window_bounds = array<i64: 8>}, {pipeline_mode = #tpu.pipeline_mode<synchronous>, transform_indices = @transform_1, window_bounds = array<i64: 4, 8, 48>}, {pipeline_mode = #tpu.pipeline_mode<synchronous>, transform_indices = @transform_2, window_bounds = array<i64: 4, 8, 1>}, {transform_indices = @transform_3, window_bounds = array<i64: 1, 48, 256>}, {transform_indices = @transform_4, window_bounds = array<i64: 1, 8, 256>}]} {
    %c0_i32 = arith.constant 0 : i32
    %0 = arith.cmpi eq, %arg1, %c0_i32 : i32
    %1 = arith.extui %0 : i1 to i32
    %c0_i32_0 = arith.constant 0 : i32
    %2 = arith.cmpi ne, %1, %c0_i32_0 : i32
    scf.if %2 {
      %c4_i32 = arith.constant 4 : i32
      %13 = arith.muli %arg0, %c4_i32 : i32
      %14 = arith.index_cast %13 : i32 to index
      %15 = memref.load %arg2[%14] : memref<8xf32, #tpu.memory_space<smem>>
      %c0_10 = arith.constant 0 : index
      %c0_11 = arith.constant 0 : index
      %c0_12 = arith.constant 0 : index
      %16 = vector.load %arg3[%c0_10, %c0_11, %c0_12] : memref<4x8x48xbf16, #tpu.memory_space<vmem>>, vector<1x8x48xbf16>
      %17 = vector.shape_cast %16 : vector<1x8x48xbf16> to vector<8x48xbf16>
      %18 = arith.extf %17 : vector<8x48xbf16> to vector<8x48xf32>
      %19 = vector.broadcast %15 : f32 to vector<8x48xf32>
      %20 = arith.mulf %19, %18 : vector<8x48xf32>
      %c0_13 = arith.constant 0 : index
      %c0_14 = arith.constant 0 : index
      %c0_15 = arith.constant 0 : index
      %21 = vector.load %arg4[%c0_13, %c0_14, %c0_15] : memref<4x8x1xf32, #tpu.memory_space<vmem>>, vector<1x8x1xf32>
      %22 = vector.shape_cast %21 : vector<1x8x1xf32> to vector<8x1xf32>
      %23 = vector.broadcast %15 : f32 to vector<8x1xf32>
      %24 = arith.mulf %23, %22 : vector<8x1xf32>
      %c4_i32_16 = arith.constant 4 : i32
      %25 = arith.muli %arg0, %c4_i32_16 : i32
      %c1_i32 = arith.constant 1 : i32
      %26 = arith.addi %25, %c1_i32 : i32
      %27 = arith.index_cast %26 : i32 to index
      %28 = memref.load %arg2[%27] : memref<8xf32, #tpu.memory_space<smem>>
      %c1 = arith.constant 1 : index
      %c0_17 = arith.constant 0 : index
      %c0_18 = arith.constant 0 : index
      %29 = vector.load %arg3[%c1, %c0_17, %c0_18] : memref<4x8x48xbf16, #tpu.memory_space<vmem>>, vector<1x8x48xbf16>
      %30 = vector.shape_cast %29 : vector<1x8x48xbf16> to vector<8x48xbf16>
      %31 = arith.extf %30 : vector<8x48xbf16> to vector<8x48xf32>
      %32 = vector.broadcast %28 : f32 to vector<8x48xf32>
      %33 = arith.mulf %32, %31 : vector<8x48xf32>
      %34 = arith.addf %20, %33 : vector<8x48xf32>
      %c1_19 = arith.constant 1 : index
      %c0_20 = arith.constant 0 : index
      %c0_21 = arith.constant 0 : index
      %35 = vector.load %arg4[%c1_19, %c0_20, %c0_21] : memref<4x8x1xf32, #tpu.memory_space<vmem>>, vector<1x8x1xf32>
      %36 = vector.shape_cast %35 : vector<1x8x1xf32> to vector<8x1xf32>
      %37 = vector.broadcast %28 : f32 to vector<8x1xf32>
      %38 = arith.mulf %37, %36 : vector<8x1xf32>
      %39 = arith.addf %24, %38 : vector<8x1xf32>
      %c4_i32_22 = arith.constant 4 : i32
      %40 = arith.muli %arg0, %c4_i32_22 : i32
      %c2_i32 = arith.constant 2 : i32
      %41 = arith.addi %40, %c2_i32 : i32
      %42 = arith.index_cast %41 : i32 to index
      %43 = memref.load %arg2[%42] : memref<8xf32, #tpu.memory_space<smem>>
      %c2 = arith.constant 2 : index
      %c0_23 = arith.constant 0 : index
      %c0_24 = arith.constant 0 : index
      %44 = vector.load %arg3[%c2, %c0_23, %c0_24] : memref<4x8x48xbf16, #tpu.memory_space<vmem>>, vector<1x8x48xbf16>
      %45 = vector.shape_cast %44 : vector<1x8x48xbf16> to vector<8x48xbf16>
      %46 = arith.extf %45 : vector<8x48xbf16> to vector<8x48xf32>
      %47 = vector.broadcast %43 : f32 to vector<8x48xf32>
      %48 = arith.mulf %47, %46 : vector<8x48xf32>
      %49 = arith.addf %34, %48 : vector<8x48xf32>
      %c2_25 = arith.constant 2 : index
      %c0_26 = arith.constant 0 : index
      %c0_27 = arith.constant 0 : index
      %50 = vector.load %arg4[%c2_25, %c0_26, %c0_27] : memref<4x8x1xf32, #tpu.memory_space<vmem>>, vector<1x8x1xf32>
      %51 = vector.shape_cast %50 : vector<1x8x1xf32> to vector<8x1xf32>
      %52 = vector.broadcast %43 : f32 to vector<8x1xf32>
      %53 = arith.mulf %52, %51 : vector<8x1xf32>
      %54 = arith.addf %39, %53 : vector<8x1xf32>
      %c4_i32_28 = arith.constant 4 : i32
      %55 = arith.muli %arg0, %c4_i32_28 : i32
      %c3_i32 = arith.constant 3 : i32
      %56 = arith.addi %55, %c3_i32 : i32
      %57 = arith.index_cast %56 : i32 to index
      %58 = memref.load %arg2[%57] : memref<8xf32, #tpu.memory_space<smem>>
      %c3 = arith.constant 3 : index
      %c0_29 = arith.constant 0 : index
      %c0_30 = arith.constant 0 : index
      %59 = vector.load %arg3[%c3, %c0_29, %c0_30] : memref<4x8x48xbf16, #tpu.memory_space<vmem>>, vector<1x8x48xbf16>
      %60 = vector.shape_cast %59 : vector<1x8x48xbf16> to vector<8x48xbf16>
      %61 = arith.extf %60 : vector<8x48xbf16> to vector<8x48xf32>
      %62 = vector.broadcast %58 : f32 to vector<8x48xf32>
      %63 = arith.mulf %62, %61 : vector<8x48xf32>
      %64 = arith.addf %49, %63 : vector<8x48xf32>
      %c3_31 = arith.constant 3 : index
      %c0_32 = arith.constant 0 : index
      %c0_33 = arith.constant 0 : index
      %65 = vector.load %arg4[%c3_31, %c0_32, %c0_33] : memref<4x8x1xf32, #tpu.memory_space<vmem>>, vector<1x8x1xf32>
      %66 = vector.shape_cast %65 : vector<1x8x1xf32> to vector<8x1xf32>
      %67 = vector.broadcast %58 : f32 to vector<8x1xf32>
      %68 = arith.mulf %67, %66 : vector<8x1xf32>
      %69 = arith.addf %54, %68 : vector<8x1xf32>
      %70 = arith.truncf %64 : vector<8x48xf32> to vector<8x48xbf16>
      %c0_34 = arith.constant 0 : index
      %c0_35 = arith.constant 0 : index
      %71 = vector.load %arg7[%c0_34, %c0_35] : memref<8x48xbf16, #tpu.memory_space<vmem>>, vector<8x48xbf16>
      tpu.vector_store %arg7[%c0_34, %c0_35], %70 {strides = array<i32>} : memref<8x48xbf16, #tpu.memory_space<vmem>>, vector<8x48xbf16>,
      %c0_36 = arith.constant 0 : index
      %c0_37 = arith.constant 0 : index
      %72 = vector.load %arg8[%c0_36, %c0_37] : memref<8x1xf32, #tpu.memory_space<vmem>>, vector<8x1xf32>
      tpu.vector_store %arg8[%c0_36, %c0_37], %69 {strides = array<i32>} : memref<8x1xf32, #tpu.memory_space<vmem>>, vector<8x1xf32>,
    } else {
    }
    %c0 = arith.constant 0 : index
    %c0_1 = arith.constant 0 : index
    %3 = vector.load %arg7[%c0, %c0_1] : memref<8x48xbf16, #tpu.memory_space<vmem>>, vector<8x48xbf16>
    %c0_2 = arith.constant 0 : index
    %c0_3 = arith.constant 0 : index
    %c0_4 = arith.constant 0 : index
    %4 = vector.load %arg5[%c0_2, %c0_3, %c0_4] : memref<1x48x256xbf16, #tpu.memory_space<vmem>>, vector<1x48x256xbf16>
    %5 = vector.shape_cast %4 : vector<1x48x256xbf16> to vector<48x256xbf16>
    %cst = arith.constant dense<0.000000e+00> : vector<8x256xf32>
    %6 = tpu.matmul %3, %5, %cst {dimension_numbers = #tpu.dot_dimension_numbers<[1], [0], [0], [1], [0, 0, 1, 1], [], []>} : vector<8x48xbf16>, vector<48x256xbf16>, vector<8x256xf32> -> vector<8x256xf32>
    %c0_5 = arith.constant 0 : index
    %c0_6 = arith.constant 0 : index
    %7 = vector.load %arg8[%c0_5, %c0_6] : memref<8x1xf32, #tpu.memory_space<vmem>>, vector<8x1xf32>
    %8 = vector.broadcast %7 : vector<8x1xf32> to vector<8x256xf32>
    %9 = arith.addf %6, %8 : vector<8x256xf32>
    %c0_7 = arith.constant 0 : index
    %c0_8 = arith.constant 0 : index
    %c0_9 = arith.constant 0 : index
    %10 = vector.load %arg6[%c0_7, %c0_8, %c0_9] : memref<1x8x256xf32, #tpu.memory_space<vmem>>, vector<1x8x256xf32>
    %11 = vector.shape_cast %10 : vector<1x8x256xf32> to vector<8x256xf32>
    %12 = vector.shape_cast %9 : vector<8x256xf32> to vector<1x8x256xf32>
    tpu.vector_store %arg6[%c0_7, %c0_8, %c0_9], %12 {strides = array<i32>} : memref<1x8x256xf32, #tpu.memory_space<vmem>>, vector<1x8x256xf32>,
    return
  }
  func.func @transform_0(%arg0: i32, %arg1: i32) -> i32 {
    %c0_i32 = arith.constant 0 : i32
    %c0_i32_0 = arith.constant 0 : i32
    return %c0_i32 : i32
  }
  func.func @transform_1(%arg0: i32, %arg1: i32) -> (i32, i32, i32) {
    %c0_i32 = arith.constant 0 : i32
    %c0_i32_0 = arith.constant 0 : i32
    %c0_i32_1 = arith.constant 0 : i32
    %c0_i32_2 = arith.constant 0 : i32
    return %c0_i32, %c0_i32_0, %c0_i32_1 : i32, i32, i32
  }
  func.func @transform_2(%arg0: i32, %arg1: i32) -> (i32, i32, i32) {
    %c0_i32 = arith.constant 0 : i32
    %c0_i32_0 = arith.constant 0 : i32
    %c0_i32_1 = arith.constant 0 : i32
    %c0_i32_2 = arith.constant 0 : i32
    return %c0_i32, %c0_i32_0, %c0_i32_1 : i32, i32, i32
  }
  func.func @transform_3(%arg0: i32, %arg1: i32) -> (i32, i32, i32) {
    %c0_i32 = arith.constant 0 : i32
    %c0_i32_0 = arith.constant 0 : i32
    return %arg0, %c0_i32, %arg1 : i32, i32, i32
  }
  func.func @transform_4(%arg0: i32, %arg1: i32) -> (i32, i32, i32) {
    %c0_i32 = arith.constant 0 : i32
    %c0_i32_0 = arith.constant 0 : i32
    return %arg0, %c0_i32, %arg1 : i32, i32, i32
  }
}

</mosaic_0001>

<llo_original>
// kernel: condconv_forward.1
$region0: #{condconv_forward.1}
  #allocation0 [shape = 'u32[]', space=smem, size = 0x4, offset = 0x4, fixed_abs, tag = 'smem constant byte address 0x4 - core index']
  #allocation1 [shape = 'u32[144,128]{1,0:T(1,128)}', space=vmem, size = 0x12000, scoped, tag = 'internal scratch']
  #allocation2 [shape = 'bf16[8,48]{1,0:T(8,128)(2,1)}', space=vmem, size = 0x800, scoped, tag = 'scratch operand']
  #allocation3 [shape = 'f32[8,1]{1,0:T(8,128)}', space=vmem, size = 0x1000, scoped, tag = 'scratch operand']
  %s0 = inlined_call_operand.vmem [shape: f32[8], index: 0, kind: input, shape index: {}]
  %s1 = inlined_call_operand.vmem [shape: bf16[4,8,48], index: 1, kind: input, shape index: {}]
  %s2 = inlined_call_operand.vmem [shape: f32[4,8,1], index: 2, kind: input, shape index: {}]
  %s3 = inlined_call_operand.vmem [shape: bf16[2,48,256], index: 3, kind: input, shape index: {}]
  %s4 = inlined_call_operand.vmem [shape: f32[2,8,256], index: 4, kind: output, shape index: {}]
  %s5 = sld [smem:[#allocation0]]
  $region57: #{condconv_forward.1} parent=0
    _
  %s7 = ssub.s32 1, %s5
  %s8 = scalar_select 0, %s7, %s5
  $region1: #{condconv_forward.1} parent=0
    #allocation4 [shape = 'u8[512]{0}', space=smem, size = 0x200, scoped, tag = 'input window, operand 0, single buffered']
    #allocation5 [shape = 's32[2]{0}', space=sflag, size = 0x8, scoped, tag = 'scoped memory for condconv_forward.1']
    %9 = vsyncpa [#allocation5], 0
    loop: start=0, step=1, limit=4
    $region2: #{condconv_forward.1} parent=1 // loop_pre_header
      _
    $region3: #{condconv_forward.1} parent=1 // loop_header
      %s11 = sphi 0, %s15
      %p12 = scmp.ge.s32.totalorder %s11, 4
      %s18 = sphi 0, %s30
      %s19 = sphi 0, %s26
      %s20 = sphi 0, %s18
      %s21 = sphi 0, %s19
      %s22 = sphi 0, %s20
      %s23 = sphi 0, %s21
      %s31 = sphi 0, %s31
      %s33 = sphi 0, %s31
      %s34 = sphi 0, %s33
      %s48 = sphi 0, %s34
      %s52 = sphi 0, %s52
      %s54 = sphi 0, %s52
      %s55 = sphi 0, %s54
      %s69 = sphi 0, %s55
      %s73 = sphi 0, %s73
      %s75 = sphi 0, %s73
      %s76 = sphi 0, %s75
      %s90 = sphi 0, %s76
      %s98 = sphi 0, %s100
      %s101 = sphi 0, %s98
      %s102 = sphi 0, %s101
      %s118 = sphi 0, %s102
      %s126 = sphi 0, %s128
      %s129 = sphi 0, %s126
      %s130 = sphi 0, %s129
      %s146 = sphi 0, %s130
    $region4: #{condconv_forward.1} parent=1 // loop_header_branch
      %14 = sbr.rel (%p12) target = $region8
    $region5: #{condconv_forward.1} parent=1 // loop_body
      %s16 = ssub.s32 %s11, 1
      %s17 = ssub.s32 %s11, 2
      %s24 = sadd.s32 1, %s19
      %p25 = scmp.ge.s32.totalorder %s24, 1
      %s26 = scalar_select %p25, 0, %s24
      %s27 = sadd.s32 1, %s18
      %s28 = scalar_select %p25, %s27, %s18
      %p29 = scmp.ge.s32.totalorder %s28, 2
      %s30 = scalar_select %p29, 0, %s28
      %s32 = sadd.s32 %s31, 1
      %p35 = scmp.eq.s32.totalorder %s11, 1
      %p36 = scmp.ne.s32.totalorder %s31, %s33
      %p37 = scmp.eq.s32.totalorder %s11, 0
      %p38 = por %p36, %p37
      %p39 = scmp.ne.s32.totalorder %s31, %s33
      %p40 = scmp.eq.s32.totalorder %s16, 1
      %p41 = por %p39, %p40
      %p42 = scmp.ne.s32.totalorder %s33, %s34
      %p43 = scmp.eq.s32.totalorder %s16, 0
      %p44 = por %p42, %p43
      %p45 = scmp.ne.s32.totalorder %s33, %s34
      %p46 = scmp.eq.s32.totalorder %s17, 1
      %p47 = por %p45, %p46
      %p49 = scmp.ne.s32.totalorder %s34, %s48
      %p50 = scmp.eq.s32.totalorder %s17, 0
      %p51 = por %p49, %p50
      %s53 = sadd.s32 %s52, 1
      %p56 = scmp.eq.s32.totalorder %s11, 1
      %p57 = scmp.ne.s32.totalorder %s52, %s54
      %p58 = scmp.eq.s32.totalorder %s11, 0
      %p59 = por %p57, %p58
      %p60 = scmp.ne.s32.totalorder %s52, %s54
      %p61 = scmp.eq.s32.totalorder %s16, 1
      %p62 = por %p60, %p61
      %p63 = scmp.ne.s32.totalorder %s54, %s55
      %p64 = scmp.eq.s32.totalorder %s16, 0
      %p65 = por %p63, %p64
      %p66 = scmp.ne.s32.totalorder %s54, %s55
      %p67 = scmp.eq.s32.totalorder %s17, 1
      %p68 = por %p66, %p67
      %p70 = scmp.ne.s32.totalorder %s55, %s69
      %p71 = scmp.eq.s32.totalorder %s17, 0
      %p72 = por %p70, %p71
      %s74 = sadd.s32 %s73, 1
      %p77 = scmp.eq.s32.totalorder %s11, 1
      %p78 = scmp.ne.s32.totalorder %s73, %s75
      %p79 = scmp.eq.s32.totalorder %s11, 0
      %p80 = por %p78, %p79
      %p81 = scmp.ne.s32.totalorder %s73, %s75
      %p82 = scmp.eq.s32.totalorder %s16, 1
      %p83 = por %p81, %p82
      %p84 = scmp.ne.s32.totalorder %s75, %s76
      %p85 = scmp.eq.s32.totalorder %s16, 0
      %p86 = por %p84, %p85
      %p87 = scmp.ne.s32.totalorder %s75, %s76
      %p88 = scmp.eq.s32.totalorder %s17, 1
      %p89 = por %p87, %p88
      %p91 = scmp.ne.s32.totalorder %s76, %s90
      %p92 = scmp.eq.s32.totalorder %s17, 0
      %p93 = por %p91, %p92
      %s94 = ssub.s32 %s18, %s30
      %s95 = ssub.s32 %s19, %s26
      %s96 = sor.u32 %s94, %s95
      %p97 = scmp.eq.s32.totalorder %s96, 0
      %s99 = sadd.s32 %s98, 1
      %s100 = scalar_select %p97, %s98, %s99
      %p103 = pneg %p97
      %p104 = scmp.eq.s32.totalorder %s11, 1
      %p105 = por %p103, %p104
      %p106 = scmp.ne.s32.totalorder %s98, %s101
      %p107 = scmp.eq.s32.totalorder %s11, 0
      %p108 = por %p106, %p107
      %p109 = scmp.ne.s32.totalorder %s98, %s101
      %p110 = scmp.eq.s32.totalorder %s16, 1
      %p111 = por %p109, %p110
      %p112 = scmp.ne.s32.totalorder %s101, %s102
      %p113 = scmp.eq.s32.totalorder %s16, 0
      %p114 = por %p112, %p113
      %p115 = scmp.ne.s32.totalorder %s101, %s102
      %p116 = scmp.eq.s32.totalorder %s17, 1
      %p117 = por %p115, %p116
      %p119 = scmp.ne.s32.totalorder %s102, %s118
      %p120 = scmp.eq.s32.totalorder %s17, 0
      %p121 = por %p119, %p120
      %s122 = ssub.s32 %s18, %s30
      %s123 = ssub.s32 %s19, %s26
      %s124 = sor.u32 %s122, %s123
      %p125 = scmp.eq.s32.totalorder %s124, 0
      %s127 = sadd.s32 %s126, 1
      %s128 = scalar_select %p125, %s126, %s127
      %p131 = pneg %p125
      %p132 = scmp.eq.s32.totalorder %s11, 1
      %p133 = por %p131, %p132
      %p134 = scmp.ne.s32.totalorder %s126, %s129
      %p135 = scmp.eq.s32.totalorder %s11, 0
      %p136 = por %p134, %p135
      %p137 = scmp.ne.s32.totalorder %s126, %s129
      %p138 = scmp.eq.s32.totalorder %s16, 1
      %p139 = por %p137, %p138
      %p140 = scmp.ne.s32.totalorder %s129, %s130
      %p141 = scmp.eq.s32.totalorder %s16, 0
      %p142 = por %p140, %p141
      %p143 = scmp.ne.s32.totalorder %s129, %s130
      %p144 = scmp.eq.s32.totalorder %s17, 1
      %p145 = por %p143, %p144
      %p147 = scmp.ne.s32.totalorder %s130, %s146
      %p148 = scmp.eq.s32.totalorder %s17, 0
      %p149 = por %p147, %p148
      %p150 = scmp.le.s32.totalorder 1, %s11
      %p151 = scmp.lt.s32.totalorder %s11, 3
      %p152 = pnand %p150, %p151
      %p153 = pneg %p152
      // Predicated region
      $region9: #{condconv_forward.1} parent=5 // pred_check
        _
      $region10: #{condconv_forward.1} parent=5 // pred_check_branch
        %155 = sbr.rel (%p152) target = $region12
      $region11: #{condconv_forward.1} parent=5 // pred_region
        %s156 = ssub.s32 %s11, 1
        // Predicated region
        $region13: #{condconv_forward.1} parent=11 // pred_check
          %p157 = pneg %p44
        $region14: #{condconv_forward.1} parent=11 // pred_check_branch
          %159 = sbr.rel (%p157) target = $region16
        $region15: #{condconv_forward.1} parent=11 // pred_region
          %s161 = ssub.s32 16, 16
          %162 = vsyncadd [#allocation5], %s161
          %s164 = sshll.u32 %s0, 4
          %s165 = int_to_ptr.vmem [resolvable:$true] %s164
          %167 = dma.vmem_to_smem %s165, 16, [#allocation4], [#allocation5]
        $region16: #{condconv_forward.1} parent=11 // pred_fallthru
          _
        // Predicated region
        $region17: #{condconv_forward.1} parent=11 // pred_check
          %p168 = pneg %p65
        $region18: #{condconv_forward.1} parent=11 // pred_check_branch
          %170 = sbr.rel (%p168) target = $region20
        $region19: #{condconv_forward.1} parent=11 // pred_region
          _
        $region20: #{condconv_forward.1} parent=11 // pred_fallthru
          _
        // Predicated region
        $region21: #{condconv_forward.1} parent=11 // pred_check
          %p171 = pneg %p86
        $region22: #{condconv_forward.1} parent=11 // pred_check_branch
          %173 = sbr.rel (%p171) target = $region24
        $region23: #{condconv_forward.1} parent=11 // pred_region
          _
        $region24: #{condconv_forward.1} parent=11 // pred_fallthru
          _
      $region12: #{condconv_forward.1} parent=5 // pred_fallthru
        _
      %p174 = scmp.lt.s32.totalorder %s11, 2
      // Predicated region
      $region25: #{condconv_forward.1} parent=5 // pred_check
        %p175 = pneg %p174
      $region26: #{condconv_forward.1} parent=5 // pred_check_branch
        %177 = sbr.rel (%p175) target = $region28
      $region27: #{condconv_forward.1} parent=5 // pred_region
        // Predicated region
        $region29: #{condconv_forward.1} parent=27 // pred_check
          %p178 = pneg %p108
        $region30: #{condconv_forward.1} parent=27 // pred_check_branch
          %180 = sbr.rel (%p178) target = $region32
        $region31: #{condconv_forward.1} parent=27 // pred_region
          %s181 = smul.u32 2, %s19
          %p182 = scmp.lt.s32.totalorder %s18, 1
          %s183 = scalar_select %p182, %s18, 1
          %p184 = scmp.lt.s32.totalorder %s181, 1
          %s185 = scalar_select %p184, %s181, 1
          %s186 = smul.addr %s183, 12
          %s187 = sadd.s32 %s185, %s186
          %s188 = smul.addr %s187, 4
          %s189 = scalar_lea.vmem %s3, %s188
          %s190 = smul.u32 2, %s19
        $region32: #{condconv_forward.1} parent=27 // pred_fallthru
          _
      $region28: #{condconv_forward.1} parent=5 // pred_fallthru
        _
      %p191 = scmp.le.s32.totalorder 1, %s11
      %p192 = scmp.lt.s32.totalorder %s11, 3
      %p193 = pnand %p191, %p192
      %p194 = pneg %p193
      // Predicated region
      $region33: #{condconv_forward.1} parent=5 // pred_check
        _
      $region34: #{condconv_forward.1} parent=5 // pred_check_branch
        %196 = sbr.rel (%p193) target = $region36
      $region35: #{condconv_forward.1} parent=5 // pred_region
        %s197 = ssub.s32 %s11, 1
        // Predicated region
        $region37: #{condconv_forward.1} parent=35 // pred_check
          %p198 = pneg %p44
        $region38: #{condconv_forward.1} parent=35 // pred_check_branch
          %200 = sbr.rel (%p198) target = $region40
        $region39: #{condconv_forward.1} parent=35 // pred_region
          %201 = dma.done [#allocation5], 16
        $region40: #{condconv_forward.1} parent=35 // pred_fallthru
          _
        %202 = sfence
        %p203 = pneg %p44
        %p204 = pneg %p41
        %p205 = pneg %p65
        %p206 = pneg %p62
        %p207 = pneg %p86
        %p208 = pneg %p83
        %s209 = smul.u32 2, %s21
        %p210 = scmp.lt.s32.totalorder %s20, 1
        %s211 = scalar_select %p210, %s20, 1
        %p212 = scmp.lt.s32.totalorder %s209, 1
        %s213 = scalar_select %p212, %s209, 1
        %s214 = smul.addr %s211, 12
        %s215 = sadd.s32 %s213, %s214
        %s216 = smul.addr %s215, 4
        %s217 = scalar_lea.vmem %s3, %s216
        %p218 = pneg %p114
        %p219 = pneg %p111
        %p220 = pneg %p142
        %p221 = pneg %p139
        %s222 = smul.u32 2, %s21
        %p223 = scmp.lt.s32.totalorder %s20, 1
        %s224 = scalar_select %p223, %s20, 1
        %p225 = scmp.lt.s32.totalorder %s222, 1
        %s226 = scalar_select %p225, %s222, 1
        %s227 = smul.addr %s224, 2
        %s228 = sadd.s32 %s226, %s227
        %s229 = smul.addr %s228, 8
        %s230 = scalar_lea.vmem %s4, %s229
        %s231 = smul.u32 2, %s21
        %p232 = scmp.lt.s32.totalorder %s20, 1
        %s233 = scalar_select %p232, %s20, 1
        %p234 = scmp.lt.s32.totalorder %s231, 1
        %s235 = scalar_select %p234, %s231, 1
        %s236 = smul.addr %s233, 12
        %s237 = sadd.s32 %s235, %s236
        %s238 = smul.addr %s237, 4
        %s239 = scalar_lea.vmem %s3, %s238
        %s240 = smul.u32 2, %s21
        %s241 = smul.u32 2, %s21
        %p242 = scmp.lt.s32.totalorder %s20, 1
        %s243 = scalar_select %p242, %s20, 1
        %p244 = scmp.lt.s32.totalorder %s241, 1
        %s245 = scalar_select %p244, %s241, 1
        %s246 = smul.addr %s243, 2
        %s247 = sadd.s32 %s245, %s246
        %s248 = smul.addr %s247, 8
        %s249 = scalar_lea.vmem %s4, %s248
        %s250 = smul.u32 2, %s21
        %p252 = scmp.eq.s32.totalorder %s21, 0
        // Predicated region
        $region41: #{condconv_forward.1} parent=35 // pred_check
          %p253 = pneg %p252
        $region42: #{condconv_forward.1} parent=35 // pred_check_branch
          %255 = sbr.rel (%p253) target = $region44
        $region43: #{condconv_forward.1} parent=35 // pred_region
          %s256 = smul.u32 %s20, 4
          %s257 = sld [smem:[#allocation4 + %s256]]
          %v258 = vld [vmem:[%s1] sm:$0xf]
          %v259 = vunpack.c.l.bf16 %v258
          %v260 = vstv %s257
          %v261 = vmul.f32 %v260, %v259
          %v262 = vld [vmem:[%s2] sm:$0xff]
          %v263 = vmul.f32 %v260, %v262
          %s264 = sadd.s32 %s256, 1
          %s265 = sld [smem:[#allocation4 + %s264]]
          %s266 = scalar_lea.vmem %s1, 4
          %v267 = vld [vmem:[%s266] sm:$0xf]
          %v268 = vunpack.c.l.bf16 %v267
          %v269 = vstv %s265
          %v270 = vmul.f32 %v269, %v268
          %v271 = vadd.f32 %v261, %v270
          %s272 = scalar_lea.vmem %s2, 8
          %v273 = vld [vmem:[%s272] sm:$0xff]
          %v274 = vmul.f32 %v269, %v273
          %v275 = vadd.f32 %v263, %v274
          %s276 = sadd.s32 %s256, 2
          %s277 = sld [smem:[#allocation4 + %s276]]
          %s278 = scalar_lea.vmem %s1, 8
          %v279 = vld [vmem:[%s278] sm:$0xf]
          %v280 = vunpack.c.l.bf16 %v279
          %v281 = vstv %s277
          %v282 = vmul.f32 %v281, %v280
          %v283 = vadd.f32 %v271, %v282
          %s284 = scalar_lea.vmem %s2, 16
          %v285 = vld [vmem:[%s284] sm:$0xff]
          %v286 = vmul.f32 %v281, %v285
          %v287 = vadd.f32 %v275, %v286
          %s288 = sadd.s32 %s256, 3
          %s289 = sld [smem:[#allocation4 + %s288]]
          %s290 = scalar_lea.vmem %s1, 12
          %v291 = vld [vmem:[%s290] sm:$0xf]
          %v292 = vunpack.c.l.bf16 %v291
          %v293 = vstv %s289
          %v294 = vmul.f32 %v293, %v292
          %v295 = vadd.f32 %v283, %v294
          %s296 = scalar_lea.vmem %s2, 24
          %v297 = vld [vmem:[%s296] sm:$0xff]
          %v298 = vmul.f32 %v293, %v297
          %v299 = vadd.f32 %v287, %v298
          %v300 = vpack.c.bf16 %v295, %v295
          %vm301 = vcmask 388096
          %302 = vst.msk [vmem:[#allocation2] sm:$0xf] %vm301, %v300
          %vm303 = vcmask 7168
          %304 = vst.msk [vmem:[#allocation3] sm:$0xff] %vm303, %v299
        $region44: #{condconv_forward.1} parent=35 // pred_fallthru
          _
        %v305 = vld [vmem:[#allocation2] sm:$0xf]
        %v306 = vld [vmem:[%s239] sm:$0xff]
        %v307 = vld [vmem:[%s239 + $0x8] sm:$0xff]
        %v308 = vld [vmem:[%s239 + $0x10] sm:$0xff]
        %v309 = vld [vmem:[%s239 + $0x18] sm:$0xff]
        %v310 = vld [vmem:[%s239 + $0x20] sm:$0xff]
        %v311 = vld [vmem:[%s239 + $0x28] sm:$0xff]
        %v312 = vld [vmem:[#allocation3] sm:$0xff]
        %314 = vset.pattern.permute.xlu0 0
        %315 = vperm.xlu0 %314, %v312
        %v316 = vpop.permute.xlu0 %315
        %v324 = vunpack.c.l.b16 %v306
        %v325 = vunpack.c.h.b16 %v306
        %v326 = vunpack.c.l.b16 %v307
        %v327 = vunpack.c.h.b16 %v307
        %v328 = vunpack.c.l.b16 %v308
        %v329 = vunpack.c.h.b16 %v308
        %v330 = vunpack.c.l.b16 %v309
        %v331 = vunpack.c.h.b16 %v309
        %v332 = vunpack.c.l.b16 %v310
        %v333 = vunpack.c.h.b16 %v310
        %v334 = vunpack.c.l.b16 %v311
        %v335 = vunpack.c.h.b16 %v311
        %v336 = vpack.c.b16 %v326, %v324
        %v337 = vpack.c.b16 %v327, %v325
        %v338 = vpack.c.b16 %v330, %v328
        %v339 = vpack.c.b16 %v331, %v329
        %v340 = vpack.c.b16 %v334, %v332
        %v341 = vpack.c.b16 %v335, %v333
        %vm348 = vcmask 392192
        %v350 = vsel %vm348, %v305, 0
        %352 = vmatprep.subr.bf16.mxu0 %v337
        %353 = vmatpush1.bf16.msra.mxu0 %v336
        %354 = vmatprep.subr.bf16.mxu0 %v339
        %355 = vmatpush1.bf16.msra.mxu0 %v338
        %356 = vmatprep.subr.bf16.mxu0 %v341
        %357 = vmatpush1.bf16.msra.mxu0 %v340
        %358 = vmatprep.subr.bf16.mxu0 0
        %359 = vmatpush1.bf16.msra.mxu0 0
        %360 = vmatprep.subr.bf16.mxu0 0
        %361 = vmatpush1.bf16.msra.mxu0 0
        %362 = vmatprep.subr.bf16.mxu0 0
        %363 = vmatpush1.bf16.msra.mxu0 0
        %364 = vmatprep.subr.bf16.mxu0 0
        %365 = vmatpush1.bf16.msra.mxu0 0
        %366 = vmatprep.subr.bf16.mxu0 0
        %367 = vmatpush1.bf16.msra.mxu0 0
        %368 = vmatprep.subr.bf16.mxu0 0
        %369 = vmatpush1.bf16.msra.mxu0 0
        %370 = vmatprep.subr.bf16.mxu0 0
        %371 = vmatpush1.bf16.msra.mxu0 0
        %372 = vmatprep.subr.bf16.mxu0 0
        %373 = vmatpush1.bf16.msra.mxu0 0
        %374 = vmatprep.subr.bf16.mxu0 0
        %375 = vmatpush1.bf16.msra.mxu0 0
        %376 = vmatprep.subr.bf16.mxu0 0
        %377 = vmatpush1.bf16.msra.mxu0 0
        %378 = vmatprep.subr.bf16.mxu0 0
        %379 = vmatpush1.bf16.msra.mxu0 0
        %380 = vmatprep.subr.bf16.mxu0 0
        %381 = vmatpush1.bf16.msra.mxu0 0
        %382 = vmatprep.subr.bf16.mxu0 0
        %383 = vmatpush1.bf16.msra.mxu0 0
        %384 = vmatprep.mubr.bf16.mxu0 0
        %385 = vmatmul.mubr.bf16.gmra.mrb[0].mxu0 %v350
        %v386 = vpop.f32.mrb[0].mxu0
        %v387 = vadd.f32 %v316, %v386
        %v388 = vpop.f32.mrb[0].mxu0
        %v389 = vadd.f32 %v316, %v388
        %v390 = vpop.f32.mrb[0].mxu0
        %v391 = vpop.f32.mrb[0].mxu0
        %392 = vdwg.mxu0
        %393 = vst [vmem:[%s249] sm:$0xff] %v387
        %394 = vst [vmem:[%s249 + $0x8] sm:$0xff] %v389
        %s395 = smul.u32 2, %s21
        %p396 = scmp.lt.s32.totalorder %s20, 1
        %s397 = scalar_select %p396, %s20, 1
        %p398 = scmp.lt.s32.totalorder %s395, 1
        %s399 = scalar_select %p398, %s395, 1
        %s400 = smul.addr %s397, 2
        %s401 = sadd.s32 %s399, %s400
        %s402 = smul.addr %s401, 8
        %s403 = scalar_lea.vmem %s4, %s402
        // Predicated region
        $region45: #{condconv_forward.1} parent=35 // pred_check
          %p404 = pneg %p139
        $region46: #{condconv_forward.1} parent=35 // pred_check_branch
          %406 = sbr.rel (%p404) target = $region48
        $region47: #{condconv_forward.1} parent=35 // pred_region
          %s407 = smul.u32 2, %s21
        $region48: #{condconv_forward.1} parent=35 // pred_fallthru
          _
      $region36: #{condconv_forward.1} parent=5 // pred_fallthru
        _
      %p408 = scmp.le.s32.totalorder 2, %s11
      // Predicated region
      $region49: #{condconv_forward.1} parent=5 // pred_check
        %p409 = pneg %p408
      $region50: #{condconv_forward.1} parent=5 // pred_check_branch
        %411 = sbr.rel (%p409) target = $region52
      $region51: #{condconv_forward.1} parent=5 // pred_region
        %s412 = ssub.s32 %s11, 2
        // Predicated region
        $region53: #{condconv_forward.1} parent=51 // pred_check
          %p413 = pneg %p145
        $region54: #{condconv_forward.1} parent=51 // pred_check_branch
          %415 = sbr.rel (%p413) target = $region56
        $region55: #{condconv_forward.1} parent=51 // pred_region
          %s416 = smul.u32 2, %s23
          %p417 = scmp.lt.s32.totalorder %s22, 1
          %s418 = scalar_select %p417, %s22, 1
          %p419 = scmp.lt.s32.totalorder %s416, 1
          %s420 = scalar_select %p419, %s416, 1
          %s421 = smul.addr %s418, 2
          %s422 = sadd.s32 %s420, %s421
          %s423 = smul.addr %s422, 8
          %s424 = scalar_lea.vmem %s4, %s423
        $region56: #{condconv_forward.1} parent=51 // pred_fallthru
          _
      $region52: #{condconv_forward.1} parent=5 // pred_fallthru
        _
    $region6: #{condconv_forward.1} parent=1 // loop_footer
      %s15 = sadd.s32 1, %s11
    $region7: #{condconv_forward.1} parent=1 // loop_footer_branch
      %10 = sbr.rel target = $region3
    $region8: #{condconv_forward.1} parent=1 // loop_exit
      _
    %425 = vsyncpa [#allocation5], 1
    %s426 = scalar_lea.sflag [#allocation5], 1
    %427 = vsyncpa %s426, 1

</llo_original>
